<compile_context>
chip_gen: v6e
topology: v6e:2x2x1
jax: 0.10.0
libtpu: 0.0.40
codegen_flags: <defaults>
</compile_context>

<pallas_src>
import math

import jax
import jax.numpy as jnp
from jax.experimental import pallas as pl
from jax.experimental.pallas import tpu as pltpu


def _round_up(x, m):
    return (x + m - 1) // m * m


def _cdiv(a, b):
    return -(-a // b)


def _sublane_pack(dtype):
    # Rows per packed sublane group: f32 -> 8, bf16/f16 -> 16, int8/fp8 -> 32.
    return max(8, 32 // jnp.dtype(dtype).itemsize)


def _make_concat_kernel(dims, aligned):
    """Build a kernel specialized to the (static) per-input widths."""
    offsets = []
    off = 0
    for d in dims:
        offsets.append(off)
        off += d

    if len(dims) == 1:
        def kernel(in_ref, out_ref):
            out_ref[...] = in_ref[...]
        return kernel

    if aligned:
        # Every D_i (hence every running offset) is a multiple of 128:
        # store each input slab straight into its lane sub-range with static,
        # 128-aligned offsets -> unmasked full-vreg stores, no concat shuffles.
        def kernel(*refs):
            *in_refs, out_ref = refs
            for r, o, d in zip(in_refs, offsets, dims):
                out_ref[:, o:o + d] = r[...]
        return kernel

    # General case: assemble the output tile in-register and do ONE
    # lane-dense, unmasked full-width store.
    def kernel(*refs):
        *in_refs, out_ref = refs
        out_ref[...] = jnp.concatenate([r[...] for r in in_refs], axis=-1)
    return kernel


def combine_concat(list_of_tensors, *, min_pallas_bytes=1 << 20):
    """Pallas equivalent of torch.cat(list_of_tensors, dim=-1)."""
    assert len(list_of_tensors) >= 1
    lead_shape = list_of_tensors[0].shape[:-1]
    dtype = list_of_tensors[0].dtype
    for t in list_of_tensors:
        assert t.shape[:-1] == lead_shape, "leading dims must match for cat(-1)"
        assert t.dtype == dtype, "dtypes must match"

    dims = [t.shape[-1] for t in list_of_tensors]
    total_d = sum(dims)
    itemsize = jnp.dtype(dtype).itemsize
    rows = int(math.prod(lead_shape)) if lead_shape else 1

    # ---- small-input fallback ----------------------------------------------
    # Below ~1 MiB the pallas_call launch + DMA fixed cost dominates and there
    # is nothing to pipeline; XLA's native concat is strictly cheaper.
    if rows * total_d * itemsize < min_pallas_bytes:
        return jnp.concatenate(list_of_tensors, axis=-1)

    flats = [t.reshape(rows, d) for t, d in zip(list_of_tensors, dims)]

    # ---- per-generation VMEM budget ------------------------------------------
    try:
        vmem_cap = int(pltpu.get_tpu_info().vmem_capacity_bytes)
    except Exception:  # off-TPU tracing / older runtimes: assume the smallest
        vmem_cap = 64 << 20
    if vmem_cap >= (128 << 20):        # v5e / v6e: 128 MiB physical VMEM
        vmem_budget = 48 << 20
        vmem_limit_cap = 96 << 20
    else:                              # v7x: 64 MiB per-TC VMEM
        vmem_budget = 20 << 20
        vmem_limit_cap = 48 << 20

    # ---- tile sizing (lane-padding aware) ------------------------------------
    # Each (rows_tile, D_i) block occupies rows_tile * round_up(D_i,128) *
    # itemsize of VMEM; double-buffering covers inputs AND the output.
    pack = _sublane_pack(dtype)
    padded_lanes = sum(_round_up(d, 128) for d in dims) + _round_up(total_d, 128)
    bytes_per_row = 2 * padded_lanes * itemsize            # x2 double-buffer
    rows_tile = max(pack, vmem_budget // max(bytes_per_row, 1))
    rows_tile = min(rows_tile, 4096)                        # diminishing returns
    rows_tile = max(pack, (rows_tile // pack) * pack)       # sublane-aligned

    if rows_tile >= rows:
        rows_tile = rows                                    # full-extent block
        n_blocks = 1
    else:
        n_blocks = _cdiv(rows, rows_tile)
        # v7x megacore: "parallel" grid axis shards across 2 TCs; prefer an
        # even block count (ideally >= 8) so neither core idles.
        max_blocks = max(1, rows // pack)
        desired = n_blocks + (n_blocks % 2)
        if max_blocks >= 8:
            desired = max(desired, 8)
        desired = min(desired, max_blocks)
        if desired != n_blocks:
            rows_tile = max(pack, _round_up(_cdiv(rows, desired), pack))
            n_blocks = _cdiv(rows, rows_tile)
    grid = (n_blocks,)

    # Derive vmem_limit from the true double-buffered footprint + headroom.
    footprint = 2 * rows_tile * padded_lanes * itemsize
    vmem_limit = min(max(footprint + (8 << 20), 32 << 20), vmem_limit_cap)

    aligned = all(d % 128 == 0 for d in dims)
    kernel_fn = _make_concat_kernel(dims, aligned)

    in_specs = [pl.BlockSpec((rows_tile, d), lambda i: (i, 0)) for d in dims]
    out_specs = pl.BlockSpec((rows_tile, total_d), lambda i: (i, 0))
    out_shape = jax.ShapeDtypeStruct((rows, total_d), dtype)

    total_bytes = rows * total_d * itemsize
    cost = pl.CostEstimate(flops=0, transcendentals=0,
                           bytes_accessed=2 * total_bytes)   # read-N + write-N

    out = pl.pallas_call(
        kernel_fn,
        out_shape=out_shape,
        grid=grid,
        in_specs=in_specs,
        out_specs=out_specs,
        compiler_params=pltpu.CompilerParams(
            dimension_semantics=("parallel",),
            vmem_limit_bytes=int(vmem_limit),
        ),
        cost_estimate=cost,
    )(*flats)
    return out.reshape(lead_shape + (total_d,))


if __name__ == "__main__":
    key = jax.random.PRNGKey(0)
    k1, k2, k3, k4, k5 = jax.random.split(key, 5)

    B, S = 2, 8

    # Case 1: unaligned widths (32/32/64) — default path hits the tiny-input
    # fallback; forcing Pallas exercises the in-register concat path.
    x1 = jax.random.normal(k1, (B, S, 32), dtype=jnp.float32)
    x2 = jax.random.normal(k2, (B, S, 32), dtype=jnp.float32)
    x3 = jax.random.normal(k3, (B, S, 64), dtype=jnp.float32)
    ref1 = jnp.concatenate([x1, x2, x3], axis=-1)

    out_fb = jax.block_until_ready(combine_concat([x1, x2, x3]))
    out_pl = jax.block_until_ready(
        combine_concat([x1, x2, x3], min_pallas_bytes=0))
    assert out_fb.shape == (B, S, 128) and out_pl.shape == (B, S, 128)
    assert out_pl.dtype == x1.dtype
    assert bool(jnp.array_equal(out_fb, ref1))
    assert bool(jnp.array_equal(out_pl, ref1))

    # Case 2: 128-aligned widths (128/256) — Pallas direct-store fast path.
    y1 = jax.random.normal(k4, (B, S, 128), dtype=jnp.float32)
    y2 = jax.random.normal(k5, (B, S, 256), dtype=jnp.float32)
    ref2 = jnp.concatenate([y1, y2], axis=-1)
    out_al = jax.block_until_ready(
        combine_concat([y1, y2], min_pallas_bytes=0))
    assert out_al.shape == (B, S, 384)
    assert bool(jnp.array_equal(out_al, ref2))

    # Case 3: bf16 aligned widths — checks sublane packing (16 rows / group).
    z1 = y1.astype(jnp.bfloat16)
    z2 = y2.astype(jnp.bfloat16)
    ref3 = jnp.concatenate([z1, z2], axis=-1)
    out_bf = jax.block_until_ready(
        combine_concat([z1, z2], min_pallas_bytes=0))
    assert out_bf.dtype == jnp.bfloat16
    assert bool(jnp.array_equal(out_bf, ref3))

    print("KERNEL_OK")
</pallas_src>

<mosaic_0001>
module attributes {stable_mosaic.version = 11 : i64} {
  func.func @kernel(%arg0: i32, %arg1: memref<16x32xf32, #tpu.memory_space<vmem>>, %arg2: memref<16x32xf32, #tpu.memory_space<vmem>>, %arg3: memref<16x64xf32, #tpu.memory_space<vmem>>, %arg4: memref<16x128xf32, #tpu.memory_space<vmem>>) attributes {dimension_semantics = [#tpu.dimension_semantics<parallel>], iteration_bounds = array<i64: 1>, scalar_prefetch = 0 : i64, scratch_operands = 0 : i64, tpu.core_type = #tpu.core_type<tc>, window_params = [{transform_indices = @transform_0, window_bounds = array<i64: 16, 32>}, {transform_indices = @transform_1, window_bounds = array<i64: 16, 32>}, {transform_indices = @transform_2, window_bounds = array<i64: 16, 64>}, {transform_indices = @transform_3, window_bounds = array<i64: 16, 128>}]} {
    %c0 = arith.constant 0 : index
    %c0_0 = arith.constant 0 : index
    %0 = vector.load %arg1[%c0, %c0_0] : memref<16x32xf32, #tpu.memory_space<vmem>>, vector<16x32xf32>
    %c0_1 = arith.constant 0 : index
    %c0_2 = arith.constant 0 : index
    %1 = vector.load %arg2[%c0_1, %c0_2] : memref<16x32xf32, #tpu.memory_space<vmem>>, vector<16x32xf32>
    %c0_3 = arith.constant 0 : index
    %c0_4 = arith.constant 0 : index
    %2 = vector.load %arg3[%c0_3, %c0_4] : memref<16x64xf32, #tpu.memory_space<vmem>>, vector<16x64xf32>
    %3 = tpu.concatenate %0, %1, %2 in 1 : vector<16x32xf32>, vector<16x32xf32>, vector<16x64xf32> -> vector<16x128xf32>
    %c0_5 = arith.constant 0 : index
    %c0_6 = arith.constant 0 : index
    %4 = vector.load %arg4[%c0_5, %c0_6] : memref<16x128xf32, #tpu.memory_space<vmem>>, vector<16x128xf32>
    tpu.vector_store %arg4[%c0_5, %c0_6], %3 {strides = array<i32>} : memref<16x128xf32, #tpu.memory_space<vmem>>, vector<16x128xf32>,
    return
  }
  func.func @transform_0(%arg0: i32) -> (i32, i32) {
    %c0_i32 = arith.constant 0 : i32
    %c0_i32_0 = arith.constant 0 : i32
    return %arg0, %c0_i32 : i32, i32
  }
  func.func @transform_1(%arg0: i32) -> (i32, i32) {
    %c0_i32 = arith.constant 0 : i32
    %c0_i32_0 = arith.constant 0 : i32
    return %arg0, %c0_i32 : i32, i32
  }
  func.func @transform_2(%arg0: i32) -> (i32, i32) {
    %c0_i32 = arith.constant 0 : i32
    %c0_i32_0 = arith.constant 0 : i32
    return %arg0, %c0_i32 : i32, i32
  }
  func.func @transform_3(%arg0: i32) -> (i32, i32) {
    %c0_i32 = arith.constant 0 : i32
    %c0_i32_0 = arith.constant 0 : i32
    return %arg0, %c0_i32 : i32, i32
  }
}

</mosaic_0001>

<llo_original>
// kernel: tpu_custom_call.1
$region0: #{tpu_custom_call.1}
  #allocation0 [shape = 'u32[]', space=smem, size = 0x4, offset = 0x4, fixed_abs, tag = 'smem constant byte address 0x4 - core index']
  #allocation1 [shape = 'u32[144,128]{1,0:T(1,128)}', space=vmem, size = 0x12000, scoped, tag = 'internal scratch']
  %s0 = inlined_call_operand.hbm [shape: f32[16,32], index: 0, kind: input, shape index: {}]
  %s1 = inlined_call_operand.hbm [shape: f32[16,32], index: 1, kind: input, shape index: {}]
  %s2 = inlined_call_operand.hbm [shape: f32[16,64], index: 2, kind: input, shape index: {}]
  %s3 = inlined_call_operand.hbm [shape: f32[16,128], index: 3, kind: output, shape index: {}]
  %s4 = sld [smem:[#allocation0]]
  $region34: #{tpu_custom_call.1} parent=0
    _
  %s6 = ssub.s32 1, %s4
  %s7 = scalar_select 0, %s6, %s4
  $region1: #{tpu_custom_call.1} parent=0
    #allocation2 [shape = 'u8[8192]{0}', space=vmem, size = 0x2000, scoped, tag = 'input window, operand 0, single buffered']
    #allocation3 [shape = 's32[1]{0}', space=sflag, size = 0x4, scoped, tag = 'scoped memory for tpu_custom_call.1']
    #allocation4 [shape = 's32[1]{0}', space=sflag, size = 0x4, scoped, tag = 'scoped memory for tpu_custom_call.1']
    #allocation5 [shape = 'u8[8192]{0}', space=vmem, size = 0x2000, scoped, tag = 'input window, operand 1, single buffered']
    #allocation6 [shape = 's32[1]{0}', space=sflag, size = 0x4, scoped, tag = 'scoped memory for tpu_custom_call.1']
    #allocation7 [shape = 'u8[8192]{0}', space=vmem, size = 0x2000, scoped, tag = 'input window, operand 2, single buffered']
    #allocation8 [shape = 'u8[8192]{0}', space=vmem, size = 0x2000, scoped, tag = 'output window, operand 0, single buffered']
    %8 = vsyncpa [#allocation3], 0
    %9 = vsyncpa [#allocation6], 0
    %10 = vsyncpa [#allocation4], 0
    // Predicated region
    $region2: #{tpu_custom_call.1} parent=1 // pred_check
      _
    $region3: #{tpu_custom_call.1} parent=1 // pred_check_branch
      %12 = sbr.rel (0) target = $region5
    $region4: #{tpu_custom_call.1} parent=1 // pred_region
      %s14 = ssub.s32 256, 256
      %15 = vsyncadd [#allocation3], %s14
      %s16 = sshll.u32 [#allocation2], 4
      %s17 = int_to_ptr.vmem [resolvable:$true] %s16
      %22 = dma.hbm_to_vmem [thread:$0]  %s0, 256, %s17, [#allocation3], 128, 128, 8
    $region5: #{tpu_custom_call.1} parent=1 // pred_fallthru
      _
    // Predicated region
    $region6: #{tpu_custom_call.1} parent=1 // pred_check
      _
    $region7: #{tpu_custom_call.1} parent=1 // pred_check_branch
      %24 = sbr.rel (0) target = $region9
    $region8: #{tpu_custom_call.1} parent=1 // pred_region
      %s26 = ssub.s32 256, 256
      %27 = vsyncadd [#allocation6], %s26
      %s28 = sshll.u32 [#allocation5], 4
      %s29 = int_to_ptr.vmem [resolvable:$true] %s28
      %34 = dma.hbm_to_vmem [thread:$0]  %s1, 256, %s29, [#allocation6], 128, 128, 8
    $region9: #{tpu_custom_call.1} parent=1 // pred_fallthru
      _
    // Predicated region
    $region10: #{tpu_custom_call.1} parent=1 // pred_check
      _
    $region11: #{tpu_custom_call.1} parent=1 // pred_check_branch
      %36 = sbr.rel (0) target = $region13
    $region12: #{tpu_custom_call.1} parent=1 // pred_region
      %s38 = ssub.s32 256, 256
      %39 = vsyncadd [#allocation6], %s38
      %s40 = sshll.u32 [#allocation7], 4
      %s41 = int_to_ptr.vmem [resolvable:$true] %s40
      %46 = dma.hbm_to_vmem [thread:$0]  %s2, 256, %s41, [#allocation6], 128, 128, 8
    $region13: #{tpu_custom_call.1} parent=1 // pred_fallthru
      _
    // Predicated region
    $region14: #{tpu_custom_call.1} parent=1 // pred_check
      _
    $region15: #{tpu_custom_call.1} parent=1 // pred_check_branch
      %48 = sbr.rel (0) target = $region17
    $region16: #{tpu_custom_call.1} parent=1 // pred_region
      %49 = dma.done [#allocation3], 256
    $region17: #{tpu_custom_call.1} parent=1 // pred_fallthru
      _
    // Predicated region
    $region18: #{tpu_custom_call.1} parent=1 // pred_check
      _
    $region19: #{tpu_custom_call.1} parent=1 // pred_check_branch
      %51 = sbr.rel (0) target = $region21
    $region20: #{tpu_custom_call.1} parent=1 // pred_region
      %52 = dma.done [#allocation6], 256
    $region21: #{tpu_custom_call.1} parent=1 // pred_fallthru
      _
    // Predicated region
    $region22: #{tpu_custom_call.1} parent=1 // pred_check
      _
    $region23: #{tpu_custom_call.1} parent=1 // pred_check_branch
      %54 = sbr.rel (0) target = $region25
    $region24: #{tpu_custom_call.1} parent=1 // pred_region
      %55 = dma.done [#allocation6], 256
    $region25: #{tpu_custom_call.1} parent=1 // pred_fallthru
      _
    %v56 = vld [vmem:[#allocation2] sm:$0xff]
    %v57 = vld [vmem:[#allocation2 + $0x8] sm:$0xff]
    %v58 = vld [vmem:[#allocation5] sm:$0xff]
    %v59 = vld [vmem:[#allocation5 + $0x8] sm:$0xff]
    %v60 = vld [vmem:[#allocation7] sm:$0xff]
    %v61 = vld [vmem:[#allocation7 + $0x8] sm:$0xff]
    %64 = vrot.lane.b32.xlu0 %v58, 32
    %v65 = vpop.permute.xlu0 %64
    %66 = vrot.lane.b32.xlu0 %v59, 32
    %v67 = vpop.permute.xlu0 %66
    %72 = vrot.lane.b32.xlu0 %v60, 64
    %v73 = vpop.permute.xlu0 %72
    %74 = vrot.lane.b32.xlu0 %v61, 64
    %v75 = vpop.permute.xlu0 %74
    %vm78 = vcmask 261120
    %v79 = vsel %vm78, %v56, %v65
    %v80 = vsel %vm78, %v57, %v67
    %vm81 = vcmask 523264
    %v82 = vsel %vm81, %v79, %v73
    %v83 = vsel %vm81, %v80, %v75
    %84 = vst [vmem:[#allocation8] sm:$0xff] %v82
    %85 = vst [vmem:[#allocation8 + $0x8] sm:$0xff] %v83
    // Predicated region
    $region26: #{tpu_custom_call.1} parent=1 // pred_check
      _
    $region27: #{tpu_custom_call.1} parent=1 // pred_check_branch
      %87 = sbr.rel (0) target = $region29
    $region28: #{tpu_custom_call.1} parent=1 // pred_region
      %s89 = ssub.s32 256, 256
      %90 = vsyncadd [#allocation4], %s89
      %s91 = sshll.u32 [#allocation8], 4
      %s92 = int_to_ptr.vmem [resolvable:$true] %s91
      %97 = dma.vmem_to_hbm [thread:$0]  %s92, 256, %s3, [#allocation4], 128, 128, 8
    $region29: #{tpu_custom_call.1} parent=1 // pred_fallthru
      _
    // Predicated region
    $region30: #{tpu_custom_call.1} parent=1 // pred_check
      _
    $region31: #{tpu_custom_call.1} parent=1 // pred_check_branch
      %99 = sbr.rel (0) target = $region33
    $region32: #{tpu_custom_call.1} parent=1 // pred_region
      %100 = dma.done [#allocation4], 256
    $region33: #{tpu_custom_call.1} parent=1 // pred_fallthru
      _
    %101 = vsyncpa [#allocation3], 1
    %102 = vsyncpa [#allocation6], 1
    %103 = vsyncpa [#allocation4], 1

</llo_original>
